<compile_context>
chip_gen: v6e
topology: v6e:2x2x1
jax: 0.10.0
libtpu: 0.0.40
codegen_flags: <defaults>
</compile_context>

<pallas_src>
import functools
import math

import jax
import jax.numpy as jnp
from jax.experimental import pallas as pl
from jax.experimental.pallas import tpu as pltpu

EPS = 1e-5
LANE = 128
SUBLANE = 8


def _prenorm_kernel(x_ref, gamma_ref, beta_ref, w_ref, b_ref, o_ref, *, inv_dim):
    """One (row-tile, n-tile) block of fused LayerNorm + Linear.

    x_ref      : (TR, D)   activation row tile (full feature axis)
    gamma/beta : (1, D)    f32 LayerNorm affine parameters
    w_ref      : (D, TN)   bf16 weight tile (TN == D on the resident-W path)
    b_ref      : (1, TN)   f32 bias tile
    o_ref      : (TR, TN)  output tile
    """
    x = x_ref[...].astype(jnp.float32)

    # Fused single-pass statistics: sum(x) and sum(x*x) in one sweep, then
    #   mean = s1/D, var = s2/D - mean^2   (biased var, PyTorch LayerNorm).
    # var is clamped at 0 (free on the VPU) to guard against catastrophic
    # cancellation when |mean| >> std, and against garbage rows in the masked
    # partial last row block.
    s1 = jnp.sum(x, axis=-1, keepdims=True)
    s2 = jnp.sum(x * x, axis=-1, keepdims=True)
    mean = s1 * inv_dim
    var = jnp.maximum(s2 * inv_dim - mean * mean, 0.0)
    inv = jax.lax.rsqrt(var + EPS)

    # LN path stays f32; gamma/beta arrive pre-cast to f32.
    ln = (x - mean) * inv * gamma_ref[...] + beta_ref[...]

    # fn = Linear(dim, dim): MXU matmul, bf16 operands, f32 accumulation,
    # bias applied as an f32 epilogue before the final cast.
    y = jnp.dot(ln.astype(w_ref.dtype), w_ref[...],
                preferred_element_type=jnp.float32)
    y = y + b_ref[...]
    o_ref[...] = y.astype(o_ref.dtype)


def _round_up(n, m):
    return ((n + m - 1) // m) * m


def _vmem_limit_bytes():
    """Per-generation VMEM limit: ~48 MiB on 64-MiB chips (v7x-class),
    ~100 MiB on 128-MiB chips (v5e/v6e)."""
    try:
        info = pltpu.get_tpu_info()
        cap = getattr(info, "vmem_capacity_bytes", 128 * 1024 * 1024)
    except Exception:
        cap = 128 * 1024 * 1024
    if cap <= 64 * 1024 * 1024:
        return 48 * 1024 * 1024
    return 100 * 1024 * 1024


def _pick_row_tile(rows, dim, n_block, vmem_limit, w_vmem_bytes, x_itemsize,
                   out_itemsize):
    """Largest row tile (multiple of 8 sublanes) such that the pipelined
    buffers, the weight footprint and the in-kernel f32 temporaries fit the
    VMEM budget; also guarantees >= 2 grid steps so both TensorCores on a
    v7x get work."""
    # Small grid-invariant params (gamma/beta/bias) footprint is negligible.
    avail = int((vmem_limit - w_vmem_bytes - 8 * dim * 4) * 0.9)
    per_row = (2 * dim * x_itemsize          # double-buffered input tile
               + 2 * n_block * out_itemsize  # double-buffered output tile
               + 3 * dim * 4                 # f32 temporaries (x, x*x, ln)
               + n_block * 4)                # f32 matmul accumulator
    avail = max(avail, SUBLANE * per_row)
    tr = max(SUBLANE, (avail // per_row) // SUBLANE * SUBLANE)
    tr = min(tr, 2048)                        # diminishing returns past ~2k rows
    tr = min(tr, max(SUBLANE, _round_up(rows, SUBLANE)))
    # Megacore guard (v7x has 2 TCs): keep at least two grid steps along the
    # row axis; harmless on single-TC v5e/v6e.
    if tr >= rows and rows > SUBLANE:
        tr = max(SUBLANE, _round_up((rows + 1) // 2, SUBLANE))
        if tr >= rows:
            tr = max(SUBLANE, (rows - 1) // SUBLANE * SUBLANE)
    return tr


def _prenorm_call(x2d, gamma, beta, w, b, *, tr, tn, n_tiled, vmem_limit,
                  single_buffer_resident):
    rows, dim = x2d.shape
    kernel = functools.partial(_prenorm_kernel, inv_dim=1.0 / dim)

    def resident_spec(shape, index_map):
        # Grid-invariant operands are fetched once; single-buffer them so they
        # don't burn 2x VMEM (reclaimed for larger row tiles).
        if single_buffer_resident:
            return pl.BlockSpec(shape, index_map, pipeline_mode=pl.Buffered(1))
        return pl.BlockSpec(shape, index_map)

    if not n_tiled:
        # Resident-W path: W/bias live in VMEM for the whole call.
        grid = (pl.cdiv(rows, tr),)
        in_specs = [
            pl.BlockSpec((tr, dim), lambda i: (i, 0)),        # x row tiles
            resident_spec((1, dim), lambda i: (0, 0)),        # gamma
            resident_spec((1, dim), lambda i: (0, 0)),        # beta
            resident_spec((dim, dim), lambda i: (0, 0)),      # W (resident)
            resident_spec((1, dim), lambda i: (0, 0)),        # bias
        ]
        out_specs = pl.BlockSpec((tr, dim), lambda i: (i, 0))
        semantics = ("parallel",)
    else:
        # N-tiled path for large dim: W blocked along its output axis; K stays
        # contiguous so no K-axis accumulator is needed.  LN is recomputed per
        # N tile (cheap vs. the matmul); the x row tile's index_map is constant
        # in j so it is only fetched when the row tile changes.
        grid = (pl.cdiv(rows, tr), pl.cdiv(dim, tn))
        in_specs = [
            pl.BlockSpec((tr, dim), lambda i, j: (i, 0)),     # x row tiles
            resident_spec((1, dim), lambda i, j: (0, 0)),     # gamma
            resident_spec((1, dim), lambda i, j: (0, 0)),     # beta
            pl.BlockSpec((dim, tn), lambda i, j: (0, j)),     # W N-tiles
            pl.BlockSpec((1, tn), lambda i, j: (0, j)),       # bias N-tiles
        ]
        out_specs = pl.BlockSpec((tr, tn), lambda i, j: (i, j))
        semantics = ("parallel", "parallel")

    return pl.pallas_call(
        kernel,
        out_shape=jax.ShapeDtypeStruct((rows, dim), x2d.dtype),
        grid_spec=pltpu.PrefetchScalarGridSpec(
            num_scalar_prefetch=0,
            grid=grid,
            in_specs=in_specs,
            out_specs=out_specs,
        ),
        compiler_params=pltpu.CompilerParams(
            dimension_semantics=semantics,
            vmem_limit_bytes=vmem_limit,
        ),
    )(x2d, gamma, beta, w, b)


def prepare_prenorm_params(gamma, beta, w, b):
    """Format parameters ONCE (at layer init), outside the per-step hot path:
    LN affine params + bias as (1, dim) f32, weight as bf16 (MXU operand).
    `w` is the (in, out) matmul matrix; pass `linear.weight.T` if coming from
    a torch nn.Linear."""
    return (gamma.reshape(1, -1).astype(jnp.float32),
            beta.reshape(1, -1).astype(jnp.float32),
            jnp.asarray(w).astype(jnp.bfloat16),
            b.reshape(1, -1).astype(jnp.float32))


def prenorm(x, gamma2d, beta2d, w, b, *, max_resident_w_bytes=None,
            tn_override=None):
    """PreNorm with fn = Linear(dim, dim):  y = LayerNorm(x) @ W + b.

    x: (..., dim); LayerNorm reduces over the last axis (nn.LayerNorm(dim)).
    gamma2d/beta2d/w/b should come from prepare_prenorm_params().
    No padding / slicing of the activation is performed: Pallas masks the
    partial last row block, and the feature axis is a full-extent block
    (lane-dense whenever dim % 128 == 0, the common transformer case).
    """
    dim = x.shape[-1]
    rows = math.prod(x.shape[:-1])
    x2d = x.reshape(rows, dim)                 # free reshape, no HBM copy

    vmem_limit = _vmem_limit_bytes()
    w_itemsize = jnp.dtype(w.dtype).itemsize
    w_bytes = dim * dim * w_itemsize
    if max_resident_w_bytes is None:
        max_resident_w_bytes = vmem_limit // 2  # leave >= half for activations
    resident = (2 * w_bytes) <= max_resident_w_bytes  # conservative (2x buffered)

    if resident:
        tn = dim
        w_vmem = 2 * w_bytes
    else:
        if tn_override is not None:
            tn = tn_override
        else:
            w_budget = int(vmem_limit * 0.4)
            tn = (w_budget // (2 * dim * w_itemsize)) // LANE * LANE
            tn = max(LANE, min(tn, _round_up(dim, LANE)))
        w_vmem = 2 * dim * tn * w_itemsize       # W N-tiles are double-buffered

    tr = _pick_row_tile(rows, dim, tn, vmem_limit, w_vmem,
                        jnp.dtype(x.dtype).itemsize,
                        jnp.dtype(x.dtype).itemsize)

    try:
        out2d = _prenorm_call(x2d, gamma2d, beta2d, w, b, tr=tr, tn=tn,
                              n_tiled=not resident, vmem_limit=vmem_limit,
                              single_buffer_resident=True)
    except Exception:
        # pipeline_mode=pl.Buffered(1) unsupported on this Pallas build ->
        # fall back to default (double) buffering; semantics unchanged.
        out2d = _prenorm_call(x2d, gamma2d, beta2d, w, b, tr=tr, tn=tn,
                              n_tiled=not resident, vmem_limit=vmem_limit,
                              single_buffer_resident=False)

    return out2d.reshape(x.shape)


def prenorm_ref_bf16(x, gamma, beta, w, b):
    """Reference mirroring the kernel's numerics (f32 LN, bf16 MXU matmul)."""
    xf = x.astype(jnp.float32)
    mean = jnp.mean(xf, axis=-1, keepdims=True)
    var = jnp.mean((xf - mean) ** 2, axis=-1, keepdims=True)
    ln = (xf - mean) * jax.lax.rsqrt(var + EPS) * gamma + beta
    y = jnp.dot(ln.astype(jnp.bfloat16), w.astype(jnp.bfloat16),
                preferred_element_type=jnp.float32) + b
    return y.astype(x.dtype)


def prenorm_ref_f32(x, gamma, beta, w, b):
    """Pure-f32 reference (mirrors PyTorch LayerNorm + Linear exactly)."""
    xf = x.astype(jnp.float32)
    mean = jnp.mean(xf, axis=-1, keepdims=True)
    var = jnp.mean((xf - mean) ** 2, axis=-1, keepdims=True)
    ln = (xf - mean) * jax.lax.rsqrt(var + EPS) * gamma + beta
    return (jnp.dot(ln, w) + b).astype(x.dtype)


if __name__ == "__main__":
    key = jax.random.PRNGKey(0)
    k_x, k_g, k_be, k_w, k_b, k_x2, k_w2, k_b2 = jax.random.split(key, 8)

    # ---- Test 1: resident-W path (lane-aligned dim, partial last row block).
    batch, seq, dim = 2, 12, 128
    x = jax.random.normal(k_x, (batch, seq, dim), dtype=jnp.float32)
    gamma = 1.0 + 0.1 * jax.random.normal(k_g, (dim,), dtype=jnp.float32)
    beta = 0.1 * jax.random.normal(k_be, (dim,), dtype=jnp.float32)
    w = jax.random.normal(k_w, (dim, dim), dtype=jnp.float32) / jnp.sqrt(dim)
    b = jax.random.normal(k_b, (dim,), dtype=jnp.float32) * 0.01

    params = prepare_prenorm_params(gamma, beta, w, b)   # hoisted out of hot path
    out = prenorm(x, *params)
    jax.block_until_ready(out)
    assert out.shape == (batch, seq, dim)

    ref16 = prenorm_ref_bf16(x, gamma, beta, w, b)
    ref32 = prenorm_ref_f32(x, gamma, beta, w, b)
    assert jnp.allclose(out, ref16, atol=5e-3, rtol=5e-3), "mismatch vs bf16 ref"
    assert jnp.allclose(out, ref32, atol=5e-2, rtol=5e-2), "mismatch vs f32 ref"

    # ---- Test 2: exercise the large-dim N-tiled path at a small size by
    # forcing the tiling decision (dim=256, tn=128 -> 2x2 grid).
    dim2 = 256
    x2 = jax.random.normal(k_x2, (batch, seq, dim2), dtype=jnp.float32)
    gamma2 = 1.0 + 0.1 * jax.random.normal(jax.random.PRNGKey(1), (dim2,),
                                           dtype=jnp.float32)
    beta2 = 0.1 * jax.random.normal(jax.random.PRNGKey(2), (dim2,),
                                    dtype=jnp.float32)
    w2 = jax.random.normal(k_w2, (dim2, dim2), dtype=jnp.float32) / jnp.sqrt(dim2)
    b2 = jax.random.normal(k_b2, (dim2,), dtype=jnp.float32) * 0.01

    params2 = prepare_prenorm_params(gamma2, beta2, w2, b2)
    out2 = prenorm(x2, *params2, max_resident_w_bytes=0, tn_override=128)
    jax.block_until_ready(out2)
    assert out2.shape == (batch, seq, dim2)

    ref16_2 = prenorm_ref_bf16(x2, gamma2, beta2, w2, b2)
    ref32_2 = prenorm_ref_f32(x2, gamma2, beta2, w2, b2)
    assert jnp.allclose(out2, ref16_2, atol=1e-2, rtol=1e-2), "N-tiled: mismatch vs bf16 ref"
    assert jnp.allclose(out2, ref32_2, atol=5e-2, rtol=5e-2), "N-tiled: mismatch vs f32 ref"

    print("KERNEL_OK")
</pallas_src>

<mosaic_0001>
module attributes {stable_mosaic.version = 11 : i64} {
  func.func @_prenorm_kernel(%arg0: i32, %arg1: memref<16x128xf32, #tpu.memory_space<vmem>>, %arg2: memref<1x128xf32, #tpu.memory_space<vmem>>, %arg3: memref<1x128xf32, #tpu.memory_space<vmem>>, %arg4: memref<128x128xbf16, #tpu.memory_space<vmem>>, %arg5: memref<1x128xf32, #tpu.memory_space<vmem>>, %arg6: memref<16x128xf32, #tpu.memory_space<vmem>>) attributes {dimension_semantics = [#tpu.dimension_semantics<parallel>], iteration_bounds = array<i64: 2>, scalar_prefetch = 0 : i64, scratch_operands = 0 : i64, tpu.core_type = #tpu.core_type<tc>, window_params = [{transform_indices = @transform_0, window_bounds = array<i64: 16, 128>}, {pipeline_mode = #tpu.pipeline_mode<synchronous>, transform_indices = @transform_1, window_bounds = array<i64: 1, 128>}, {pipeline_mode = #tpu.pipeline_mode<synchronous>, transform_indices = @transform_2, window_bounds = array<i64: 1, 128>}, {pipeline_mode = #tpu.pipeline_mode<synchronous>, transform_indices = @transform_3, window_bounds = array<i64: 128, 128>}, {pipeline_mode = #tpu.pipeline_mode<synchronous>, transform_indices = @transform_4, window_bounds = array<i64: 1, 128>}, {transform_indices = @transform_5, window_bounds = array<i64: 16, 128>}]} {
    %c0 = arith.constant 0 : index
    %c0_0 = arith.constant 0 : index
    %0 = vector.load %arg1[%c0, %c0_0] : memref<16x128xf32, #tpu.memory_space<vmem>>, vector<16x128xf32>
    %cst = arith.constant dense<0.000000e+00> : vector<16xf32>
    %1 = vector.multi_reduction <add>, %0, %cst [1] : vector<16x128xf32> to vector<16xf32>
    %2 = vector.shape_cast %1 : vector<16xf32> to vector<16x1xf32>
    %3 = arith.mulf %0, %0 : vector<16x128xf32>
    %cst_1 = arith.constant dense<0.000000e+00> : vector<16xf32>
    %4 = vector.multi_reduction <add>, %3, %cst_1 [1] : vector<16x128xf32> to vector<16xf32>
    %5 = vector.shape_cast %4 : vector<16xf32> to vector<16x1xf32>
    %cst_2 = arith.constant 7.812500e-03 : f32
    %6 = vector.broadcast %cst_2 : f32 to vector<16x1xf32>
    %7 = arith.mulf %2, %6 : vector<16x1xf32>
    %cst_3 = arith.constant 7.812500e-03 : f32
    %8 = vector.broadcast %cst_3 : f32 to vector<16x1xf32>
    %9 = arith.mulf %5, %8 : vector<16x1xf32>
    %10 = arith.mulf %7, %7 : vector<16x1xf32>
    %11 = arith.subf %9, %10 : vector<16x1xf32>
    %cst_4 = arith.constant 0.000000e+00 : f32
    %12 = vector.broadcast %cst_4 : f32 to vector<16x1xf32>
    %13 = arith.maximumf %11, %12 : vector<16x1xf32>
    %cst_5 = arith.constant 9.99999974E-6 : f32
    %14 = vector.broadcast %cst_5 : f32 to vector<16x1xf32>
    %15 = arith.addf %13, %14 : vector<16x1xf32>
    %16 = math.rsqrt %15 : vector<16x1xf32>
    %17 = vector.broadcast %7 : vector<16x1xf32> to vector<16x128xf32>
    %18 = arith.subf %0, %17 : vector<16x128xf32>
    %19 = vector.broadcast %16 : vector<16x1xf32> to vector<16x128xf32>
    %20 = arith.mulf %18, %19 : vector<16x128xf32>
    %c0_6 = arith.constant 0 : index
    %c0_7 = arith.constant 0 : index
    %21 = vector.load %arg2[%c0_6, %c0_7] : memref<1x128xf32, #tpu.memory_space<vmem>>, vector<1x128xf32>
    %22 = vector.broadcast %21 : vector<1x128xf32> to vector<16x128xf32>
    %23 = arith.mulf %20, %22 : vector<16x128xf32>
    %c0_8 = arith.constant 0 : index
    %c0_9 = arith.constant 0 : index
    %24 = vector.load %arg3[%c0_8, %c0_9] : memref<1x128xf32, #tpu.memory_space<vmem>>, vector<1x128xf32>
    %25 = vector.broadcast %24 : vector<1x128xf32> to vector<16x128xf32>
    %26 = arith.addf %23, %25 : vector<16x128xf32>
    %27 = arith.truncf %26 : vector<16x128xf32> to vector<16x128xbf16>
    %c0_10 = arith.constant 0 : index
    %c0_11 = arith.constant 0 : index
    %28 = vector.load %arg4[%c0_10, %c0_11] : memref<128x128xbf16, #tpu.memory_space<vmem>>, vector<128x128xbf16>
    %cst_12 = arith.constant dense<0.000000e+00> : vector<16x128xf32>
    %29 = tpu.matmul %27, %28, %cst_12 {dimension_numbers = #tpu.dot_dimension_numbers<[1], [0], [0], [1], [0, 0, 1, 1], [], []>} : vector<16x128xbf16>, vector<128x128xbf16>, vector<16x128xf32> -> vector<16x128xf32>
    %c0_13 = arith.constant 0 : index
    %c0_14 = arith.constant 0 : index
    %30 = vector.load %arg5[%c0_13, %c0_14] : memref<1x128xf32, #tpu.memory_space<vmem>>, vector<1x128xf32>
    %31 = vector.broadcast %30 : vector<1x128xf32> to vector<16x128xf32>
    %32 = arith.addf %29, %31 : vector<16x128xf32>
    %c0_15 = arith.constant 0 : index
    %c0_16 = arith.constant 0 : index
    %33 = vector.load %arg6[%c0_15, %c0_16] : memref<16x128xf32, #tpu.memory_space<vmem>>, vector<16x128xf32>
    tpu.vector_store %arg6[%c0_15, %c0_16], %32 {strides = array<i32>} : memref<16x128xf32, #tpu.memory_space<vmem>>, vector<16x128xf32>,
    return
  }
  func.func @transform_0(%arg0: i32) -> (i32, i32) {
    %c0_i32 = arith.constant 0 : i32
    %c0_i32_0 = arith.constant 0 : i32
    return %arg0, %c0_i32 : i32, i32
  }
  func.func @transform_1(%arg0: i32) -> (i32, i32) {
    %c0_i32 = arith.constant 0 : i32
    %c0_i32_0 = arith.constant 0 : i32
    %c0_i32_1 = arith.constant 0 : i32
    return %c0_i32, %c0_i32_0 : i32, i32
  }
  func.func @transform_2(%arg0: i32) -> (i32, i32) {
    %c0_i32 = arith.constant 0 : i32
    %c0_i32_0 = arith.constant 0 : i32
    %c0_i32_1 = arith.constant 0 : i32
    return %c0_i32, %c0_i32_0 : i32, i32
  }
  func.func @transform_3(%arg0: i32) -> (i32, i32) {
    %c0_i32 = arith.constant 0 : i32
    %c0_i32_0 = arith.constant 0 : i32
    %c0_i32_1 = arith.constant 0 : i32
    return %c0_i32, %c0_i32_0 : i32, i32
  }
  func.func @transform_4(%arg0: i32) -> (i32, i32) {
    %c0_i32 = arith.constant 0 : i32
    %c0_i32_0 = arith.constant 0 : i32
    %c0_i32_1 = arith.constant 0 : i32
    return %c0_i32, %c0_i32_0 : i32, i32
  }
  func.func @transform_5(%arg0: i32) -> (i32, i32) {
    %c0_i32 = arith.constant 0 : i32
    %c0_i32_0 = arith.constant 0 : i32
    return %arg0, %c0_i32 : i32, i32
  }
}

module attributes {stable_mosaic.version = 11 : i64} {
  func.func @_prenorm_kernel(%arg0: i32, %arg1: memref<16x128xf32, #tpu.memory_space<vmem>>, %arg2: memref<1x128xf32, #tpu.memory_space<vmem>>, %arg3: memref<1x128xf32, #tpu.memory_space<vmem>>, %arg4: memref<128x128xbf16, #tpu.memory_space<vmem>>, %arg5: memref<1x128xf32, #tpu.memory_space<vmem>>, %arg6: memref<16x128xf32, #tpu.memory_space<vmem>>) attributes {dimension_semantics = [#tpu.dimension_semantics<parallel>], iteration_bounds = array<i64: 2>, scalar_prefetch = 0 : i64, scratch_operands = 0 : i64, tpu.core_type = #tpu.core_type<tc>, window_params = [{transform_indices = @transform_0, window_bounds = array<i64: 16, 128>}, {pipeline_mode = #tpu.pipeline_mode<synchronous>, transform_indices = @transform_1, window_bounds = array<i64: 1, 128>}, {pipeline_mode = #tpu.pipeline_mode<synchronous>, transform_indices = @transform_2, window_bounds = array<i64: 1, 128>}, {pipeline_mode = #tpu.pipeline_mode<synchronous>, transform_indices = @transform_3, window_bounds = array<i64: 128, 128>}, {pipeline_mode = #tpu.pipeline_mode<synchronous>, transform_indices = @transform_4, window_bounds = array<i64: 1, 128>}, {transform_indices = @transform_5, window_bounds = array<i64: 16, 128>}]} {
    %c0 = arith.constant 0 : index
    %c0_0 = arith.constant 0 : index
    %0 = vector.load %arg1[%c0, %c0_0] : memref<16x128xf32, #tpu.memory_space<vmem>>, vector<16x128xf32>
    %cst = arith.constant dense<0.000000e+00> : vector<16xf32>
    %1 = vector.multi_reduction <add>, %0, %cst [1] : vector<16x128xf32> to vector<16xf32>
    %2 = vector.shape_cast %1 : vector<16xf32> to vector<16x1xf32>
    %3 = arith.mulf %0, %0 : vector<16x128xf32>
    %cst_1 = arith.constant dense<0.000000e+00> : vector<16xf32>
    %4 = vector.multi_reduction <add>, %3, %cst_1 [1] : vector<16x128xf32> to vector<16xf32>
    %5 = vector.shape_cast %4 : vector<16xf32> to vector<16x1xf32>
    %cst_2 = arith.constant 7.812500e-03 : f32
    %6 = vector.broadcast %cst_2 : f32 to vector<16x1xf32>
    %7 = arith.mulf %2, %6 : vector<16x1xf32>
    %cst_3 = arith.constant 7.812500e-03 : f32
    %8 = vector.broadcast %cst_3 : f32 to vector<16x1xf32>
    %9 = arith.mulf %5, %8 : vector<16x1xf32>
    %10 = arith.mulf %7, %7 : vector<16x1xf32>
    %11 = arith.subf %9, %10 : vector<16x1xf32>
    %cst_4 = arith.constant 0.000000e+00 : f32
    %12 = vector.broadcast %cst_4 : f32 to vector<16x1xf32>
    %13 = arith.maximumf %11, %12 : vector<16x1xf32>
    %cst_5 = arith.constant 9.99999974E-6 : f32
    %14 = vector.broadcast %cst_5 : f32 to vector<16x1xf32>
    %15 = arith.addf %13, %14 : vector<16x1xf32>
    %16 = math.rsqrt %15 : vector<16x1xf32>
    %17 = vector.broadcast %7 : vector<16x1xf32> to vector<16x128xf32>
    %18 = arith.subf %0, %17 : vector<16x128xf32>
    %19 = vector.broadcast %16 : vector<16x1xf32> to vector<16x128xf32>
    %20 = arith.mulf %18, %19 : vector<16x128xf32>
    %c0_6 = arith.constant 0 : index
    %c0_7 = arith.constant 0 : index
    %21 = vector.load %arg2[%c0_6, %c0_7] : memref<1x128xf32, #tpu.memory_space<vmem>>, vector<1x128xf32>
    %22 = vector.broadcast %21 : vector<1x128xf32> to vector<16x128xf32>
    %23 = arith.mulf %20, %22 : vector<16x128xf32>
    %c0_8 = arith.constant 0 : index
    %c0_9 = arith.constant 0 : index
    %24 = vector.load %arg3[%c0_8, %c0_9] : memref<1x128xf32, #tpu.memory_space<vmem>>, vector<1x128xf32>
    %25 = vector.broadcast %24 : vector<1x128xf32> to vector<16x128xf32>
    %26 = arith.addf %23, %25 : vector<16x128xf32>
    %27 = arith.truncf %26 : vector<16x128xf32> to vector<16x128xbf16>
    %c0_10 = arith.constant 0 : index
    %c0_11 = arith.constant 0 : index
    %28 = vector.load %arg4[%c0_10, %c0_11] : memref<128x128xbf16, #tpu.memory_space<vmem>>, vector<128x128xbf16>
    %cst_12 = arith.constant dense<0.000000e+00> : vector<16x128xf32>
    %29 = tpu.matmul %27, %28, %cst_12 {dimension_numbers = #tpu.dot_dimension_numbers<[1], [0], [0], [1], [0, 0, 1, 1], [], []>} : vector<16x128xbf16>, vector<128x128xbf16>, vector<16x128xf32> -> vector<16x128xf32>
    %c0_13 = arith.constant 0 : index
    %c0_14 = arith.constant 0 : index
    %30 = vector.load %arg5[%c0_13, %c0_14] : memref<1x128xf32, #tpu.memory_space<vmem>>, vector<1x128xf32>
    %31 = vector.broadcast %30 : vector<1x128xf32> to vector<16x128xf32>
    %32 = arith.addf %29, %31 : vector<16x128xf32>
    %c0_15 = arith.constant 0 : index
    %c0_16 = arith.constant 0 : index
    %33 = vector.load %arg6[%c0_15, %c0_16] : memref<16x128xf32, #tpu.memory_space<vmem>>, vector<16x128xf32>
    tpu.vector_store %arg6[%c0_15, %c0_16], %32 {strides = array<i32>} : memref<16x128xf32, #tpu.memory_space<vmem>>, vector<16x128xf32>,
    return
  }
  func.func @transform_0(%arg0: i32) -> (i32, i32) {
    %c0_i32 = arith.constant 0 : i32
    %c0_i32_0 = arith.constant 0 : i32
    return %arg0, %c0_i32 : i32, i32
  }
  func.func @transform_1(%arg0: i32) -> (i32, i32) {
    %c0_i32 = arith.constant 0 : i32
    %c0_i32_0 = arith.constant 0 : i32
    %c0_i32_1 = arith.constant 0 : i32
    return %c0_i32, %c0_i32_0 : i32, i32
  }
  func.func @transform_2(%arg0: i32) -> (i32, i32) {
    %c0_i32 = arith.constant 0 : i32
    %c0_i32_0 = arith.constant 0 : i32
    %c0_i32_1 = arith.constant 0 : i32
    return %c0_i32, %c0_i32_0 : i32, i32
  }
  func.func @transform_3(%arg0: i32) -> (i32, i32) {
    %c0_i32 = arith.constant 0 : i32
    %c0_i32_0 = arith.constant 0 : i32
    %c0_i32_1 = arith.constant 0 : i32
    return %c0_i32, %c0_i32_0 : i32, i32
  }
  func.func @transform_4(%arg0: i32) -> (i32, i32) {
    %c0_i32 = arith.constant 0 : i32
    %c0_i32_0 = arith.constant 0 : i32
    %c0_i32_1 = arith.constant 0 : i32
    return %c0_i32, %c0_i32_0 : i32, i32
  }
  func.func @transform_5(%arg0: i32) -> (i32, i32) {
    %c0_i32 = arith.constant 0 : i32
    %c0_i32_0 = arith.constant 0 : i32
    return %arg0, %c0_i32 : i32, i32
  }
}

</mosaic_0001>

<llo_original>
// kernel: tpu_custom_call.1
$region0: #{tpu_custom_call.1}
  #allocation0 [shape = 'u32[]', space=smem, size = 0x4, offset = 0x4, fixed_abs, tag = 'smem constant byte address 0x4 - core index']
  #allocation1 [shape = 'u32[144,128]{1,0:T(1,128)}', space=vmem, size = 0x12000, scoped, tag = 'internal scratch']
  %s0 = inlined_call_operand.hbm [shape: f32[24,128], index: 0, kind: input, shape index: {}]
  %s1 = inlined_call_operand.vmem [shape: f32[1,128], index: 1, kind: input, shape index: {}]
  %s2 = inlined_call_operand.vmem [shape: f32[1,128], index: 2, kind: input, shape index: {}]
  %s3 = inlined_call_operand.hbm [shape: bf16[128,128], index: 3, kind: input, shape index: {}]
  %s4 = inlined_call_operand.vmem [shape: f32[1,128], index: 4, kind: input, shape index: {}]
  %s5 = inlined_call_operand.hbm [shape: f32[24,128], index: 5, kind: output, shape index: {}]
  %s6 = sld [smem:[#allocation0]]
  $region61: #{tpu_custom_call.1} parent=0
    _
  %s8 = ssub.s32 1, %s6
  %s9 = scalar_select 0, %s8, %s6
  $region1: #{tpu_custom_call.1} parent=0
    #allocation2 [shape = 'u8[16384]{0}', space=vmem, size = 0x4000, scoped, tag = 'input window, operand 0']
    #allocation3 [shape = 's32[2]{0}', space=sflag, size = 0x8, scoped, tag = 'scoped memory for tpu_custom_call.1']
    #allocation4 [shape = 's32[2]{0}', space=sflag, size = 0x8, scoped, tag = 'scoped memory for tpu_custom_call.1']
    #allocation5 [shape = 'u8[32768]{0}', space=vmem, size = 0x8000, scoped, tag = 'input window, operand 3, single buffered']
    #allocation6 [shape = 's32[1]{0}', space=sflag, size = 0x4, scoped, tag = 'scoped memory for tpu_custom_call.1']
    #allocation7 [shape = 'u8[16384]{0}', space=vmem, size = 0x4000, scoped, tag = 'output window, operand 0']
    %10 = vsyncpa [#allocation3], 0
    %s11 = scalar_lea.sflag [#allocation3], 1
    %12 = vsyncpa %s11, 0
    %13 = vsyncpa [#allocation6], 0
    %14 = vsyncpa [#allocation4], 0
    %s15 = scalar_lea.sflag [#allocation4], 1
    %16 = vsyncpa %s15, 0
    loop: start=0, step=1, limit=4
    $region2: #{tpu_custom_call.1} parent=1 // loop_pre_header
      _
    $region3: #{tpu_custom_call.1} parent=1 // loop_header
      %s18 = sphi 0, %s22
      %p19 = scmp.ge.s32.totalorder %s18, 4
      %s28 = sphi 0, %s30
      %s31 = sphi 0, %s28
      %s32 = sphi 0, %s31
      %s48 = sphi 0, %s32
      %s52 = sphi 0, %s52
      %s54 = sphi 0, %s52
      %s55 = sphi 0, %s54
      %s69 = sphi 0, %s55
      %s73 = sphi 0, %s73
      %s75 = sphi 0, %s73
      %s76 = sphi 0, %s75
      %s90 = sphi 0, %s76
      %s94 = sphi 0, %s94
      %s96 = sphi 0, %s94
      %s97 = sphi 0, %s96
      %s111 = sphi 0, %s97
      %s115 = sphi 0, %s115
      %s117 = sphi 0, %s115
      %s118 = sphi 0, %s117
      %s132 = sphi 0, %s118
      %s138 = sphi 0, %s140
      %s141 = sphi 0, %s138
      %s142 = sphi 0, %s141
      %s158 = sphi 0, %s142
    $region4: #{tpu_custom_call.1} parent=1 // loop_header_branch
      %21 = sbr.rel (%p19) target = $region8
    $region5: #{tpu_custom_call.1} parent=1 // loop_body
      %s23 = ssub.s32 %s18, 1
      %s24 = ssub.s32 %s18, 2
      %s25 = sadd.s32 %s18, 1
      %s26 = ssub.s32 %s18, %s25
      %p27 = scmp.eq.s32.totalorder %s26, 0
      %s29 = sadd.s32 %s28, 1
      %s30 = scalar_select %p27, %s28, %s29
      %p33 = pneg %p27
      %p34 = scmp.eq.s32.totalorder %s18, 1
      %p35 = por %p33, %p34
      %p36 = scmp.ne.s32.totalorder %s28, %s31
      %p37 = scmp.eq.s32.totalorder %s18, 0
      %p38 = por %p36, %p37
      %p39 = scmp.ne.s32.totalorder %s28, %s31
      %p40 = scmp.eq.s32.totalorder %s23, 1
      %p41 = por %p39, %p40
      %p42 = scmp.ne.s32.totalorder %s31, %s32
      %p43 = scmp.eq.s32.totalorder %s23, 0
      %p44 = por %p42, %p43
      %p45 = scmp.ne.s32.totalorder %s31, %s32
      %p46 = scmp.eq.s32.totalorder %s24, 1
      %p47 = por %p45, %p46
      %p49 = scmp.ne.s32.totalorder %s32, %s48
      %p50 = scmp.eq.s32.totalorder %s24, 0
      %p51 = por %p49, %p50
      %s53 = sadd.s32 %s52, 1
      %p56 = scmp.eq.s32.totalorder %s18, 1
      %p57 = scmp.ne.s32.totalorder %s52, %s54
      %p58 = scmp.eq.s32.totalorder %s18, 0
      %p59 = por %p57, %p58
      %p60 = scmp.ne.s32.totalorder %s52, %s54
      %p61 = scmp.eq.s32.totalorder %s23, 1
      %p62 = por %p60, %p61
      %p63 = scmp.ne.s32.totalorder %s54, %s55
      %p64 = scmp.eq.s32.totalorder %s23, 0
      %p65 = por %p63, %p64
      %p66 = scmp.ne.s32.totalorder %s54, %s55
      %p67 = scmp.eq.s32.totalorder %s24, 1
      %p68 = por %p66, %p67
      %p70 = scmp.ne.s32.totalorder %s55, %s69
      %p71 = scmp.eq.s32.totalorder %s24, 0
      %p72 = por %p70, %p71
      %s74 = sadd.s32 %s73, 1
      %p77 = scmp.eq.s32.totalorder %s18, 1
      %p78 = scmp.ne.s32.totalorder %s73, %s75
      %p79 = scmp.eq.s32.totalorder %s18, 0
      %p80 = por %p78, %p79
      %p81 = scmp.ne.s32.totalorder %s73, %s75
      %p82 = scmp.eq.s32.totalorder %s23, 1
      %p83 = por %p81, %p82
      %p84 = scmp.ne.s32.totalorder %s75, %s76
      %p85 = scmp.eq.s32.totalorder %s23, 0
      %p86 = por %p84, %p85
      %p87 = scmp.ne.s32.totalorder %s75, %s76
      %p88 = scmp.eq.s32.totalorder %s24, 1
      %p89 = por %p87, %p88
      %p91 = scmp.ne.s32.totalorder %s76, %s90
      %p92 = scmp.eq.s32.totalorder %s24, 0
      %p93 = por %p91, %p92
      %s95 = sadd.s32 %s94, 1
      %p98 = scmp.eq.s32.totalorder %s18, 1
      %p99 = scmp.ne.s32.totalorder %s94, %s96
      %p100 = scmp.eq.s32.totalorder %s18, 0
      %p101 = por %p99, %p100
      %p102 = scmp.ne.s32.totalorder %s94, %s96
      %p103 = scmp.eq.s32.totalorder %s23, 1
      %p104 = por %p102, %p103
      %p105 = scmp.ne.s32.totalorder %s96, %s97
      %p106 = scmp.eq.s32.totalorder %s23, 0
      %p107 = por %p105, %p106
      %p108 = scmp.ne.s32.totalorder %s96, %s97
      %p109 = scmp.eq.s32.totalorder %s24, 1
      %p110 = por %p108, %p109
      %p112 = scmp.ne.s32.totalorder %s97, %s111
      %p113 = scmp.eq.s32.totalorder %s24, 0
      %p114 = por %p112, %p113
      %s116 = sadd.s32 %s115, 1
      %p119 = scmp.eq.s32.totalorder %s18, 1
      %p120 = scmp.ne.s32.totalorder %s115, %s117
      %p121 = scmp.eq.s32.totalorder %s18, 0
      %p122 = por %p120, %p121
      %p123 = scmp.ne.s32.totalorder %s115, %s117
      %p124 = scmp.eq.s32.totalorder %s23, 1
      %p125 = por %p123, %p124
      %p126 = scmp.ne.s32.totalorder %s117, %s118
      %p127 = scmp.eq.s32.totalorder %s23, 0
      %p128 = por %p126, %p127
      %p129 = scmp.ne.s32.totalorder %s117, %s118
      %p130 = scmp.eq.s32.totalorder %s24, 1
      %p131 = por %p129, %p130
      %p133 = scmp.ne.s32.totalorder %s118, %s132
      %p134 = scmp.eq.s32.totalorder %s24, 0
      %p135 = por %p133, %p134
      %s136 = ssub.s32 %s18, %s25
      %p137 = scmp.eq.s32.totalorder %s136, 0
      %s139 = sadd.s32 %s138, 1
      %s140 = scalar_select %p137, %s138, %s139
      %p143 = pneg %p137
      %p144 = scmp.eq.s32.totalorder %s18, 1
      %p145 = por %p143, %p144
      %p146 = scmp.ne.s32.totalorder %s138, %s141
      %p147 = scmp.eq.s32.totalorder %s18, 0
      %p148 = por %p146, %p147
      %p149 = scmp.ne.s32.totalorder %s138, %s141
      %p150 = scmp.eq.s32.totalorder %s23, 1
      %p151 = por %p149, %p150
      %p152 = scmp.ne.s32.totalorder %s141, %s142
      %p153 = scmp.eq.s32.totalorder %s23, 0
      %p154 = por %p152, %p153
      %p155 = scmp.ne.s32.totalorder %s141, %s142
      %p156 = scmp.eq.s32.totalorder %s24, 1
      %p157 = por %p155, %p156
      %p159 = scmp.ne.s32.totalorder %s142, %s158
      %p160 = scmp.eq.s32.totalorder %s24, 0
      %p161 = por %p159, %p160
      %p162 = scmp.le.s32.totalorder 1, %s18
      %p163 = scmp.lt.s32.totalorder %s18, 3
      %p164 = pnand %p162, %p163
      %p165 = pneg %p164
      // Predicated region
      $region9: #{tpu_custom_call.1} parent=5 // pred_check
        _
      $region10: #{tpu_custom_call.1} parent=5 // pred_check_branch
        %167 = sbr.rel (%p164) target = $region12
      $region11: #{tpu_custom_call.1} parent=5 // pred_region
        %s168 = ssub.s32 %s18, 1
        // Predicated region
        $region13: #{tpu_custom_call.1} parent=11 // pred_check
          %p169 = pneg %p65
        $region14: #{tpu_custom_call.1} parent=11 // pred_check_branch
          %171 = sbr.rel (%p169) target = $region16
        $region15: #{tpu_custom_call.1} parent=11 // pred_region
          _
        $region16: #{tpu_custom_call.1} parent=11 // pred_fallthru
          _
        // Predicated region
        $region17: #{tpu_custom_call.1} parent=11 // pred_check
          %p172 = pneg %p86
        $region18: #{tpu_custom_call.1} parent=11 // pred_check_branch
          %174 = sbr.rel (%p172) target = $region20
        $region19: #{tpu_custom_call.1} parent=11 // pred_region
          _
        $region20: #{tpu_custom_call.1} parent=11 // pred_fallthru
          _
        // Predicated region
        $region21: #{tpu_custom_call.1} parent=11 // pred_check
          %p175 = pneg %p107
        $region22: #{tpu_custom_call.1} parent=11 // pred_check_branch
          %177 = sbr.rel (%p175) target = $region24
        $region23: #{tpu_custom_call.1} parent=11 // pred_region
          %s179 = ssub.s32 1024, 1024
          %180 = vsyncadd [#allocation6], %s179
          %s181 = sshll.u32 [#allocation5], 4
          %s182 = int_to_ptr.vmem [resolvable:$true] %s181
          %187 = dma.hbm_to_vmem [thread:$0]  %s3, 1024, %s182, [#allocation6], 64, 64, 4
        $region24: #{tpu_custom_call.1} parent=11 // pred_fallthru
          _
        // Predicated region
        $region25: #{tpu_custom_call.1} parent=11 // pred_check
          %p188 = pneg %p128
        $region26: #{tpu_custom_call.1} parent=11 // pred_check_branch
          %190 = sbr.rel (%p188) target = $region28
        $region27: #{tpu_custom_call.1} parent=11 // pred_region
          _
        $region28: #{tpu_custom_call.1} parent=11 // pred_fallthru
          _
      $region12: #{tpu_custom_call.1} parent=5 // pred_fallthru
        _
      %p191 = scmp.lt.s32.totalorder %s18, 2
      // Predicated region
      $region29: #{tpu_custom_call.1} parent=5 // pred_check
        %p192 = pneg %p191
      $region30: #{tpu_custom_call.1} parent=5 // pred_check_branch
        %194 = sbr.rel (%p192) target = $region32
      $region31: #{tpu_custom_call.1} parent=5 // pred_region
        // Predicated region
        $region33: #{tpu_custom_call.1} parent=31 // pred_check
          %p195 = pneg %p38
        $region34: #{tpu_custom_call.1} parent=31 // pred_check_branch
          %197 = sbr.rel (%p195) target = $region36
        $region35: #{tpu_custom_call.1} parent=31 // pred_region
          %s198 = sand.u32 %s28, 1
          %s199 = scalar_lea.sflag [#allocation3], %s198
          %s200 = sand.u32 %s28, 1
          %s201 = smul.addr %s200, 16
          %s202 = scalar_lea.vmem [#allocation2], %s201
          %s203 = smul.u32 2, %s18
          %s204 = ssub.s32 3, %s203
          %p205 = scmp.lt.s32.totalorder %s204, 2
          %s206 = scalar_select %p205, %s204, 2
          %s207 = smul.u32 128, %s206
          %s209 = ssub.s32 256, %s207
          %210 = vsyncadd %s199, %s209
          %p211 = scmp.ne.s32.totalorder 0, %s207
          %s212 = smul.addr %s203, 128
          %s213 = scalar_lea.hbm %s0, %s212
          %s214 = smul.u32 8, %s206
          %s215 = sshll.u32 %s202, 4
          %s216 = int_to_ptr.vmem [resolvable:$true] %s215
          %s217 = sshll.u32 %s214, 4
          %221 = dma.hbm_to_vmem [thread:$0]  (%p211), %s213, %s217, %s216, %s199, 128, 128, 8
        $region36: #{tpu_custom_call.1} parent=31 // pred_fallthru
          _
      $region32: #{tpu_custom_call.1} parent=5 // pred_fallthru
        _
      %p222 = scmp.le.s32.totalorder 1, %s18
      %p223 = scmp.lt.s32.totalorder %s18, 3
      %p224 = pnand %p222, %p223
      %p225 = pneg %p224
      // Predicated region
      $region37: #{tpu_custom_call.1} parent=5 // pred_check
        _
      $region38: #{tpu_custom_call.1} parent=5 // pred_check_branch
        %227 = sbr.rel (%p224) target = $region40
      $region39: #{tpu_custom_call.1} parent=5 // pred_region
        %s228 = ssub.s32 %s18, 1
        %s229 = sand.u32 %s31, 1
        %s230 = scalar_lea.sflag [#allocation3], %s229
        %s231 = sand.u32 %s31, 1
        %s232 = smul.addr %s231, 16
        %s233 = scalar_lea.vmem [#allocation2], %s232
        // Predicated region
        $region41: #{tpu_custom_call.1} parent=39 // pred_check
          %p234 = pneg %p44
        $region42: #{tpu_custom_call.1} parent=39 // pred_check_branch
          %236 = sbr.rel (%p234) target = $region44
        $region43: #{tpu_custom_call.1} parent=39 // pred_region
          %237 = dma.done %s230, 256
        $region44: #{tpu_custom_call.1} parent=39 // pred_fallthru
          _
        // Predicated region
        $region45: #{tpu_custom_call.1} parent=39 // pred_check
          %p238 = pneg %p107
        $region46: #{tpu_custom_call.1} parent=39 // pred_check_branch
          %240 = sbr.rel (%p238) target = $region48
        $region47: #{tpu_custom_call.1} parent=39 // pred_region
          %241 = dma.done [#allocation6], 1024
        $region48: #{tpu_custom_call.1} parent=39 // pred_fallthru
          _
        %s242 = sand.u32 %s31, 1
        %s243 = scalar_lea.sflag [#allocation3], %s242
        %s244 = sand.u32 %s31, 1
        %s245 = smul.addr %s244, 16
        %s246 = scalar_lea.vmem [#allocation2], %s245
        %p247 = pneg %p44
        %p248 = pneg %p41
        %p249 = pneg %p65
        %p250 = pneg %p62
        %p251 = pneg %p86
        %p252 = pneg %p83
        %p253 = pneg %p107
        %p254 = pneg %p104
        %p255 = pneg %p128
        %p256 = pneg %p125
        %p257 = pneg %p154
        %p258 = pneg %p151
        %s259 = sand.u32 %s141, 1
        %s260 = scalar_lea.sflag [#allocation4], %s259
        %s261 = sand.u32 %s141, 1
        %s262 = smul.addr %s261, 16
        %s263 = scalar_lea.vmem [#allocation7], %s262
        %s264 = smul.u32 2, %s23
        %s265 = ssub.s32 3, %s264
        %p266 = scmp.lt.s32.totalorder %s265, 2
        %s267 = scalar_select %p266, %s265, 2
        %s268 = smul.u32 128, %s267
        %s269 = smul.u32 2, %s23
        %s270 = ssub.s32 3, %s269
        %p271 = scmp.lt.s32.totalorder %s270, 2
        %s272 = scalar_select %p271, %s270, 2
        %s273 = smul.u32 128, %s272
        %v275 = vld [vmem:[%s233] sm:$0xff]
        %v276 = vld [vmem:[%s233 + $0x8] sm:$0xff]
        %277 = vadd.xlane.f32.xlu0 %v275
        %v278 = vpop.xlane.xlu0 %277
        %279 = vadd.xlane.f32.xlu0 %v276
        %v280 = vpop.xlane.xlu0 %279
        %v281 = vmul.f32 %v275, %v275
        %v282 = vmul.f32 %v276, %v276
        %283 = vadd.xlane.f32.xlu0 %v281
        %v284 = vpop.xlane.xlu0 %283
        %285 = vadd.xlane.f32.xlu0 %v282
        %v286 = vpop.xlane.xlu0 %285
        %v287 = vmul.f32 %v278, 0.0078125
        %v288 = vmul.f32 %v280, 0.0078125
        %v289 = vmul.f32 %v284, 0.0078125
        %v290 = vmul.f32 %v286, 0.0078125
        %v291 = vmul.f32 %v287, %v287
        %v292 = vmul.f32 %v288, %v288
        %v293 = vsub.f32 %v289, %v291
        %v294 = vsub.f32 %v290, %v292
        %v295 = vmax.f32 %v293, 0.0
        %v296 = vmax.f32 %v294, 0.0
        %v297 = vadd.f32 %v295, 1e-05
        %v298 = vadd.f32 %v296, 1e-05
        %v299 = vrsqrt.pop %v297
        %v300 = vrsqrt.pop %v298
        %v301 = vsub.f32 %v275, %v287
        %v302 = vsub.f32 %v276, %v288
        %v303 = vmul.f32 %v301, %v299
        %v304 = vmul.f32 %v302, %v300
        %v305 = vld [vmem:[%s1] sm:$0x1]
        %v307 = vlaneseq
        %v308 = vshrl.u32 %v307, 7
        %v309 = vsub.s32 0, %v308
        %v310 = vrot.slane %v305, %v309
        %v312 = vmul.f32 %v303, %v310
        %v313 = vmul.f32 %v304, %v310
        %v314 = vld [vmem:[%s2] sm:$0x1]
        %v316 = vlaneseq
        %v317 = vshrl.u32 %v316, 7
        %v318 = vsub.s32 0, %v317
        %v319 = vrot.slane %v314, %v318
        %v321 = vadd.f32 %v312, %v319
        %v322 = vadd.f32 %v313, %v319
        %v323 = vpack.c.bf16 %v322, %v321
        %v324 = vld [vmem:[#allocation5] sm:$0xf]
        %v325 = vld [vmem:[#allocation5 + $0x4] sm:$0xf]
        %v326 = vld [vmem:[#allocation5 + $0x8] sm:$0xf]
        %v327 = vld [vmem:[#allocation5 + $0xc] sm:$0xf]
        %v328 = vld [vmem:[#allocation5 + $0x10] sm:$0xf]
        %v329 = vld [vmem:[#allocation5 + $0x14] sm:$0xf]
        %v330 = vld [vmem:[#allocation5 + $0x18] sm:$0xf]
        %v331 = vld [vmem:[#allocation5 + $0x1c] sm:$0xf]
        %v332 = vld [vmem:[#allocation5 + $0x20] sm:$0xf]
        %v333 = vld [vmem:[#allocation5 + $0x24] sm:$0xf]
        %v334 = vld [vmem:[#allocation5 + $0x28] sm:$0xf]
        %v335 = vld [vmem:[#allocation5 + $0x2c] sm:$0xf]
        %v336 = vld [vmem:[#allocation5 + $0x30] sm:$0xf]
        %v337 = vld [vmem:[#allocation5 + $0x34] sm:$0xf]
        %v338 = vld [vmem:[#allocation5 + $0x38] sm:$0xf]
        %v339 = vld [vmem:[#allocation5 + $0x3c] sm:$0xf]
        %v340 = vld [vmem:[%s4] sm:$0x1]
        %v342 = vlaneseq
        %v343 = vshrl.u32 %v342, 7
        %v344 = vsub.s32 0, %v343
        %v345 = vrot.slane %v340, %v344
        %v363 = vunpack.c.l.b16 %v324
        %v364 = vunpack.c.l.b16 %v325
        %v365 = vunpack.c.l.b16 %v326
        %v366 = vunpack.c.l.b16 %v327
        %v367 = vunpack.c.l.b16 %v328
        %v368 = vunpack.c.l.b16 %v329
        %v369 = vunpack.c.l.b16 %v330
        %v370 = vunpack.c.l.b16 %v331
        %v371 = vunpack.c.l.b16 %v332
        %v372 = vunpack.c.l.b16 %v333
        %v373 = vunpack.c.l.b16 %v334
        %v374 = vunpack.c.l.b16 %v335
        %v375 = vunpack.c.l.b16 %v336
        %v376 = vunpack.c.l.b16 %v337
        %v377 = vunpack.c.l.b16 %v338
        %v378 = vunpack.c.l.b16 %v339
        %v379 = vpack.c.b16 %v364, %v363
        %v380 = vpack.c.b16 %v366, %v365
        %v381 = vpack.c.b16 %v368, %v367
        %v382 = vpack.c.b16 %v370, %v369
        %v383 = vpack.c.b16 %v372, %v371
        %v384 = vpack.c.b16 %v374, %v373
        %v385 = vpack.c.b16 %v376, %v375
        %v386 = vpack.c.b16 %v378, %v377
        %395 = vmatprep.subr.bf16.mxu0 0
        %396 = vmatpush1.bf16.msra.mxu0 %v386
        %397 = vmatprep.subr.bf16.mxu0 0
        %398 = vmatpush1.bf16.msra.mxu0 %v385
        %399 = vmatprep.subr.bf16.mxu0 0
        %400 = vmatpush1.bf16.msra.mxu0 %v384
        %401 = vmatprep.subr.bf16.mxu0 0
        %402 = vmatpush1.bf16.msra.mxu0 %v383
        %403 = vmatprep.subr.bf16.mxu0 0
        %404 = vmatpush1.bf16.msra.mxu0 %v382
        %405 = vmatprep.subr.bf16.mxu0 0
        %406 = vmatpush1.bf16.msra.mxu0 %v381
        %407 = vmatprep.subr.bf16.mxu0 0
        %408 = vmatpush1.bf16.msra.mxu0 %v380
        %409 = vmatprep.subr.bf16.mxu0 0
        %410 = vmatpush1.bf16.msra.mxu0 %v379
        %411 = vmatprep.subr.bf16.mxu0 0
        %412 = vmatpush2.bf16.msra.mxu0 0
        %413 = vmatprep.subr.bf16.mxu0 0
        %414 = vmatpush2.bf16.msra.mxu0 0
        %415 = vmatprep.subr.bf16.mxu0 0
        %416 = vmatpush2.bf16.msra.mxu0 0
        %417 = vmatprep.subr.bf16.mxu0 0
        %418 = vmatpush2.bf16.msra.mxu0 0
        %419 = vmatprep.subr.bf16.mxu0 0
        %420 = vmatpush2.bf16.msra.mxu0 0
        %421 = vmatprep.subr.bf16.mxu0 0
        %422 = vmatpush2.bf16.msra.mxu0 0
        %423 = vmatprep.subr.bf16.mxu0 0
        %424 = vmatpush2.bf16.msra.mxu0 0
        %425 = vmatprep.subr.bf16.mxu0 0
        %426 = vmatpush2.bf16.msra.mxu0 0
        %427 = vmatprep.mubr.bf16.mxu0 0
        %428 = vmatmul.mubr.bf16.gmra.mxu0 %v323
        %v429 = vpop.f32.mrf.mxu0
        %v430 = vadd.f32 %v345, %v429
        %v431 = vpop.f32.mrf.mxu0
        %v432 = vpop.f32.mrf.mxu0
        %v433 = vadd.f32 %v345, %v432
        %v434 = vpop.f32.mrf.mxu0
        %435 = vdwg.mxu0
        %436 = vst [vmem:[%s263] sm:$0xff] %v430
        %437 = vst [vmem:[%s263 + $0x8] sm:$0xff] %v433
        %s438 = sand.u32 %s141, 1
        %s439 = scalar_lea.sflag [#allocation4], %s438
        %s440 = sand.u32 %s141, 1
        %s441 = smul.addr %s440, 16
        %s442 = scalar_lea.vmem [#allocation7], %s441
        // Predicated region
        $region49: #{tpu_custom_call.1} parent=39 // pred_check
          %p443 = pneg %p151
        $region50: #{tpu_custom_call.1} parent=39 // pred_check_branch
          %445 = sbr.rel (%p443) target = $region52
        $region51: #{tpu_custom_call.1} parent=39 // pred_region
          %s446 = smul.u32 2, %s23
          %s447 = ssub.s32 3, %s446
          %p448 = scmp.lt.s32.totalorder %s447, 2
          %s449 = scalar_select %p448, %s447, 2
          %s450 = smul.u32 128, %s449
          %s452 = ssub.s32 256, %s450
          %453 = vsyncadd %s439, %s452
          %p454 = scmp.ne.s32.totalorder 0, %s450
          %s455 = smul.addr %s446, 128
          %s456 = scalar_lea.hbm %s5, %s455
          %s457 = smul.u32 8, %s449
          %s458 = sshll.u32 %s442, 4
          %s459 = int_to_ptr.vmem [resolvable:$true] %s458
          %s460 = sshll.u32 %s457, 4
          %464 = dma.vmem_to_hbm [thread:$0]  (%p454), %s459, %s460, %s456, %s439, 128, 128, 8
        $region52: #{tpu_custom_call.1} parent=39 // pred_fallthru
          _
      $region40: #{tpu_custom_call.1} parent=5 // pred_fallthru
        _
      %p465 = scmp.le.s32.totalorder 2, %s18
      // Predicated region
      $region53: #{tpu_custom_call.1} parent=5 // pred_check
        %p466 = pneg %p465
      $region54: #{tpu_custom_call.1} parent=5 // pred_check_branch
        %468 = sbr.rel (%p466) target = $region56
      $region55: #{tpu_custom_call.1} parent=5 // pred_region
        %s469 = ssub.s32 %s18, 2
        // Predicated region
        $region57: #{tpu_custom_call.1} parent=55 // pred_check
          %p470 = pneg %p157
        $region58: #{tpu_custom_call.1} parent=55 // pred_check_branch
          %472 = sbr.rel (%p470) target = $region60
        $region59: #{tpu_custom_call.1} parent=55 // pred_region
          %s473 = sand.u32 %s142, 1
          %s474 = scalar_lea.sflag [#allocation4], %s473
          %s475 = sand.u32 %s142, 1
          %s476 = smul.addr %s475, 16
          %s477 = scalar_lea.vmem [#allocation7], %s476
          %478 = dma.done %s474, 256
        $region60: #{tpu_custom_call.1} parent=55 // pred_fallthru
          _
      $region56: #{tpu_custom_call.1} parent=5 // pred_fallthru
        _
    $region6: #{tpu_custom_call.1} parent=1 // loop_footer
      %s22 = sadd.s32 1, %s18
    $region7: #{tpu_custom_call.1} parent=1 // loop_footer_branch
      %17 = sbr.rel target = $region3
    $region8: #{tpu_custom_call.1} parent=1 // loop_exit
      _
    %479 = vsyncpa [#allocation3], 1
    %s480 = scalar_lea.sflag [#allocation3], 1
    %481 = vsyncpa %s480, 1
    %482 = vsyncpa [#allocation6], 1
    %483 = vsyncpa [#allocation4], 1
    %s484 = scalar_lea.sflag [#allocation4], 1
    %485 = vsyncpa %s484, 1

// kernel: tpu_custom_call.1
$region0: #{tpu_custom_call.1}
  #allocation0 [shape = 'u32[]', space=smem, size = 0x4, offset = 0x4, fixed_abs, tag = 'smem constant byte address 0x4 - core index']
  #allocation1 [shape = 'u32[144,128]{1,0:T(1,128)}', space=vmem, size = 0x12000, scoped, tag = 'internal scratch']
  %s0 = inlined_call_operand.hbm [shape: f32[24,128], index: 0, kind: input, shape index: {}]
  %s1 = inlined_call_operand.vmem [shape: f32[1,128], index: 1, kind: input, shape index: {}]
  %s2 = inlined_call_operand.vmem [shape: f32[1,128], index: 2, kind: input, shape index: {}]
  %s3 = inlined_call_operand.hbm [shape: bf16[128,128], index: 3, kind: input, shape index: {}]
  %s4 = inlined_call_operand.vmem [shape: f32[1,128], index: 4, kind: input, shape index: {}]
  %s5 = inlined_call_operand.hbm [shape: f32[24,128], index: 5, kind: output, shape index: {}]
  %s6 = sld [smem:[#allocation0]]
  $region61: #{tpu_custom_call.1} parent=0
    _
  %s8 = ssub.s32 1, %s6
  %s9 = scalar_select 0, %s8, %s6
  $region1: #{tpu_custom_call.1} parent=0
    #allocation2 [shape = 'u8[16384]{0}', space=vmem, size = 0x4000, scoped, tag = 'input window, operand 0']
    #allocation3 [shape = 's32[2]{0}', space=sflag, size = 0x8, scoped, tag = 'scoped memory for tpu_custom_call.1']
    #allocation4 [shape = 's32[2]{0}', space=sflag, size = 0x8, scoped, tag = 'scoped memory for tpu_custom_call.1']
    #allocation5 [shape = 'u8[32768]{0}', space=vmem, size = 0x8000, scoped, tag = 'input window, operand 3, single buffered']
    #allocation6 [shape = 's32[1]{0}', space=sflag, size = 0x4, scoped, tag = 'scoped memory for tpu_custom_call.1']
    #allocation7 [shape = 'u8[16384]{0}', space=vmem, size = 0x4000, scoped, tag = 'output window, operand 0']
    %10 = vsyncpa [#allocation3], 0
    %s11 = scalar_lea.sflag [#allocation3], 1
    %12 = vsyncpa %s11, 0
    %13 = vsyncpa [#allocation6], 0
    %14 = vsyncpa [#allocation4], 0
    %s15 = scalar_lea.sflag [#allocation4], 1
    %16 = vsyncpa %s15, 0
    loop: start=0, step=1, limit=4
    $region2: #{tpu_custom_call.1} parent=1 // loop_pre_header
      _
    $region3: #{tpu_custom_call.1} parent=1 // loop_header
      %s18 = sphi 0, %s22
      %p19 = scmp.ge.s32.totalorder %s18, 4
      %s28 = sphi 0, %s30
      %s31 = sphi 0, %s28
      %s32 = sphi 0, %s31
      %s48 = sphi 0, %s32
      %s52 = sphi 0, %s52
      %s54 = sphi 0, %s52
      %s55 = sphi 0, %s54
      %s69 = sphi 0, %s55
      %s73 = sphi 0, %s73
      %s75 = sphi 0, %s73
      %s76 = sphi 0, %s75
      %s90 = sphi 0, %s76
      %s94 = sphi 0, %s94
      %s96 = sphi 0, %s94
      %s97 = sphi 0, %s96
      %s111 = sphi 0, %s97
      %s115 = sphi 0, %s115
      %s117 = sphi 0, %s115
      %s118 = sphi 0, %s117
      %s132 = sphi 0, %s118
      %s138 = sphi 0, %s140
      %s141 = sphi 0, %s138
      %s142 = sphi 0, %s141
      %s158 = sphi 0, %s142
    $region4: #{tpu_custom_call.1} parent=1 // loop_header_branch
      %21 = sbr.rel (%p19) target = $region8
    $region5: #{tpu_custom_call.1} parent=1 // loop_body
      %s23 = ssub.s32 %s18, 1
      %s24 = ssub.s32 %s18, 2
      %s25 = sadd.s32 %s18, 1
      %s26 = ssub.s32 %s18, %s25
      %p27 = scmp.eq.s32.totalorder %s26, 0
      %s29 = sadd.s32 %s28, 1
      %s30 = scalar_select %p27, %s28, %s29
      %p33 = pneg %p27
      %p34 = scmp.eq.s32.totalorder %s18, 1
      %p35 = por %p33, %p34
      %p36 = scmp.ne.s32.totalorder %s28, %s31
      %p37 = scmp.eq.s32.totalorder %s18, 0
      %p38 = por %p36, %p37
      %p39 = scmp.ne.s32.totalorder %s28, %s31
      %p40 = scmp.eq.s32.totalorder %s23, 1
      %p41 = por %p39, %p40
      %p42 = scmp.ne.s32.totalorder %s31, %s32
      %p43 = scmp.eq.s32.totalorder %s23, 0
      %p44 = por %p42, %p43
      %p45 = scmp.ne.s32.totalorder %s31, %s32
      %p46 = scmp.eq.s32.totalorder %s24, 1
      %p47 = por %p45, %p46
      %p49 = scmp.ne.s32.totalorder %s32, %s48
      %p50 = scmp.eq.s32.totalorder %s24, 0
      %p51 = por %p49, %p50
      %s53 = sadd.s32 %s52, 1
      %p56 = scmp.eq.s32.totalorder %s18, 1
      %p57 = scmp.ne.s32.totalorder %s52, %s54
      %p58 = scmp.eq.s32.totalorder %s18, 0
      %p59 = por %p57, %p58
      %p60 = scmp.ne.s32.totalorder %s52, %s54
      %p61 = scmp.eq.s32.totalorder %s23, 1
      %p62 = por %p60, %p61
      %p63 = scmp.ne.s32.totalorder %s54, %s55
      %p64 = scmp.eq.s32.totalorder %s23, 0
      %p65 = por %p63, %p64
      %p66 = scmp.ne.s32.totalorder %s54, %s55
      %p67 = scmp.eq.s32.totalorder %s24, 1
      %p68 = por %p66, %p67
      %p70 = scmp.ne.s32.totalorder %s55, %s69
      %p71 = scmp.eq.s32.totalorder %s24, 0
      %p72 = por %p70, %p71
      %s74 = sadd.s32 %s73, 1
      %p77 = scmp.eq.s32.totalorder %s18, 1
      %p78 = scmp.ne.s32.totalorder %s73, %s75
      %p79 = scmp.eq.s32.totalorder %s18, 0
      %p80 = por %p78, %p79
      %p81 = scmp.ne.s32.totalorder %s73, %s75
      %p82 = scmp.eq.s32.totalorder %s23, 1
      %p83 = por %p81, %p82
      %p84 = scmp.ne.s32.totalorder %s75, %s76
      %p85 = scmp.eq.s32.totalorder %s23, 0
      %p86 = por %p84, %p85
      %p87 = scmp.ne.s32.totalorder %s75, %s76
      %p88 = scmp.eq.s32.totalorder %s24, 1
      %p89 = por %p87, %p88
      %p91 = scmp.ne.s32.totalorder %s76, %s90
      %p92 = scmp.eq.s32.totalorder %s24, 0
      %p93 = por %p91, %p92
      %s95 = sadd.s32 %s94, 1
      %p98 = scmp.eq.s32.totalorder %s18, 1
      %p99 = scmp.ne.s32.totalorder %s94, %s96
      %p100 = scmp.eq.s32.totalorder %s18, 0
      %p101 = por %p99, %p100
      %p102 = scmp.ne.s32.totalorder %s94, %s96
      %p103 = scmp.eq.s32.totalorder %s23, 1
      %p104 = por %p102, %p103
      %p105 = scmp.ne.s32.totalorder %s96, %s97
      %p106 = scmp.eq.s32.totalorder %s23, 0
      %p107 = por %p105, %p106
      %p108 = scmp.ne.s32.totalorder %s96, %s97
      %p109 = scmp.eq.s32.totalorder %s24, 1
      %p110 = por %p108, %p109
      %p112 = scmp.ne.s32.totalorder %s97, %s111
      %p113 = scmp.eq.s32.totalorder %s24, 0
      %p114 = por %p112, %p113
      %s116 = sadd.s32 %s115, 1
      %p119 = scmp.eq.s32.totalorder %s18, 1
      %p120 = scmp.ne.s32.totalorder %s115, %s117
      %p121 = scmp.eq.s32.totalorder %s18, 0
      %p122 = por %p120, %p121
      %p123 = scmp.ne.s32.totalorder %s115, %s117
      %p124 = scmp.eq.s32.totalorder %s23, 1
      %p125 = por %p123, %p124
      %p126 = scmp.ne.s32.totalorder %s117, %s118
      %p127 = scmp.eq.s32.totalorder %s23, 0
      %p128 = por %p126, %p127
      %p129 = scmp.ne.s32.totalorder %s117, %s118
      %p130 = scmp.eq.s32.totalorder %s24, 1
      %p131 = por %p129, %p130
      %p133 = scmp.ne.s32.totalorder %s118, %s132
      %p134 = scmp.eq.s32.totalorder %s24, 0
      %p135 = por %p133, %p134
      %s136 = ssub.s32 %s18, %s25
      %p137 = scmp.eq.s32.totalorder %s136, 0
      %s139 = sadd.s32 %s138, 1
      %s140 = scalar_select %p137, %s138, %s139
      %p143 = pneg %p137
      %p144 = scmp.eq.s32.totalorder %s18, 1
      %p145 = por %p143, %p144
      %p146 = scmp.ne.s32.totalorder %s138, %s141
      %p147 = scmp.eq.s32.totalorder %s18, 0
      %p148 = por %p146, %p147
      %p149 = scmp.ne.s32.totalorder %s138, %s141
      %p150 = scmp.eq.s32.totalorder %s23, 1
      %p151 = por %p149, %p150
      %p152 = scmp.ne.s32.totalorder %s141, %s142
      %p153 = scmp.eq.s32.totalorder %s23, 0
      %p154 = por %p152, %p153
      %p155 = scmp.ne.s32.totalorder %s141, %s142
      %p156 = scmp.eq.s32.totalorder %s24, 1
      %p157 = por %p155, %p156
      %p159 = scmp.ne.s32.totalorder %s142, %s158
      %p160 = scmp.eq.s32.totalorder %s24, 0
      %p161 = por %p159, %p160
      %p162 = scmp.le.s32.totalorder 1, %s18
      %p163 = scmp.lt.s32.totalorder %s18, 3
      %p164 = pnand %p162, %p163
      %p165 = pneg %p164
      // Predicated region
      $region9: #{tpu_custom_call.1} parent=5 // pred_check
        _
      $region10: #{tpu_custom_call.1} parent=5 // pred_check_branch
        %167 = sbr.rel (%p164) target = $region12
      $region11: #{tpu_custom_call.1} parent=5 // pred_region
        %s168 = ssub.s32 %s18, 1
        // Predicated region
        $region13: #{tpu_custom_call.1} parent=11 // pred_check
          %p169 = pneg %p65
        $region14: #{tpu_custom_call.1} parent=11 // pred_check_branch
          %171 = sbr.rel (%p169) target = $region16
        $region15: #{tpu_custom_call.1} parent=11 // pred_region
          _
        $region16: #{tpu_custom_call.1} parent=11 // pred_fallthru
          _
        // Predicated region
        $region17: #{tpu_custom_call.1} parent=11 // pred_check
          %p172 = pneg %p86
        $region18: #{tpu_custom_call.1} parent=11 // pred_check_branch
          %174 = sbr.rel (%p172) target = $region20
        $region19: #{tpu_custom_call.1} parent=11 // pred_region
          _
        $region20: #{tpu_custom_call.1} parent=11 // pred_fallthru
          _
        // Predicated region
        $region21: #{tpu_custom_call.1} parent=11 // pred_check
          %p175 = pneg %p107
        $region22: #{tpu_custom_call.1} parent=11 // pred_check_branch
          %177 = sbr.rel (%p175) target = $region24
        $region23: #{tpu_custom_call.1} parent=11 // pred_region
          %s179 = ssub.s32 1024, 1024
          %180 = vsyncadd [#allocation6], %s179
          %s181 = sshll.u32 [#allocation5], 4
          %s182 = int_to_ptr.vmem [resolvable:$true] %s181
          %187 = dma.hbm_to_vmem [thread:$0]  %s3, 1024, %s182, [#allocation6], 64, 64, 4
        $region24: #{tpu_custom_call.1} parent=11 // pred_fallthru
          _
        // Predicated region
        $region25: #{tpu_custom_call.1} parent=11 // pred_check
          %p188 = pneg %p128
        $region26: #{tpu_custom_call.1} parent=11 // pred_check_branch
          %190 = sbr.rel (%p188) target = $region28
        $region27: #{tpu_custom_call.1} parent=11 // pred_region
          _
        $region28: #{tpu_custom_call.1} parent=11 // pred_fallthru
          _
      $region12: #{tpu_custom_call.1} parent=5 // pred_fallthru
        _
      %p191 = scmp.lt.s32.totalorder %s18, 2
      // Predicated region
      $region29: #{tpu_custom_call.1} parent=5 // pred_check
        %p192 = pneg %p191
      $region30: #{tpu_custom_call.1} parent=5 // pred_check_branch
        %194 = sbr.rel (%p192) target = $region32
      $region31: #{tpu_custom_call.1} parent=5 // pred_region
        // Predicated region
        $region33: #{tpu_custom_call.1} parent=31 // pred_check
          %p195 = pneg %p38
        $region34: #{tpu_custom_call.1} parent=31 // pred_check_branch
          %197 = sbr.rel (%p195) target = $region36
        $region35: #{tpu_custom_call.1} parent=31 // pred_region
          %s198 = sand.u32 %s28, 1
          %s199 = scalar_lea.sflag [#allocation3], %s198
          %s200 = sand.u32 %s28, 1
          %s201 = smul.addr %s200, 16
          %s202 = scalar_lea.vmem [#allocation2], %s201
          %s203 = smul.u32 2, %s18
          %s204 = ssub.s32 3, %s203
          %p205 = scmp.lt.s32.totalorder %s204, 2
          %s206 = scalar_select %p205, %s204, 2
          %s207 = smul.u32 128, %s206
          %s209 = ssub.s32 256, %s207
          %210 = vsyncadd %s199, %s209
          %p211 = scmp.ne.s32.totalorder 0, %s207
          %s212 = smul.addr %s203, 128
          %s213 = scalar_lea.hbm %s0, %s212
          %s214 = smul.u32 8, %s206
          %s215 = sshll.u32 %s202, 4
          %s216 = int_to_ptr.vmem [resolvable:$true] %s215
          %s217 = sshll.u32 %s214, 4
          %221 = dma.hbm_to_vmem [thread:$0]  (%p211), %s213, %s217, %s216, %s199, 128, 128, 8
        $region36: #{tpu_custom_call.1} parent=31 // pred_fallthru
          _
      $region32: #{tpu_custom_call.1} parent=5 // pred_fallthru
        _
      %p222 = scmp.le.s32.totalorder 1, %s18
      %p223 = scmp.lt.s32.totalorder %s18, 3
      %p224 = pnand %p222, %p223
      %p225 = pneg %p224
      // Predicated region
      $region37: #{tpu_custom_call.1} parent=5 // pred_check
        _
      $region38: #{tpu_custom_call.1} parent=5 // pred_check_branch
        %227 = sbr.rel (%p224) target = $region40
      $region39: #{tpu_custom_call.1} parent=5 // pred_region
        %s228 = ssub.s32 %s18, 1
        %s229 = sand.u32 %s31, 1
        %s230 = scalar_lea.sflag [#allocation3], %s229
        %s231 = sand.u32 %s31, 1
        %s232 = smul.addr %s231, 16
        %s233 = scalar_lea.vmem [#allocation2], %s232
        // Predicated region
        $region41: #{tpu_custom_call.1} parent=39 // pred_check
          %p234 = pneg %p44
        $region42: #{tpu_custom_call.1} parent=39 // pred_check_branch
          %236 = sbr.rel (%p234) target = $region44
        $region43: #{tpu_custom_call.1} parent=39 // pred_region
          %237 = dma.done %s230, 256
        $region44: #{tpu_custom_call.1} parent=39 // pred_fallthru
          _
        // Predicated region
        $region45: #{tpu_custom_call.1} parent=39 // pred_check
          %p238 = pneg %p107
        $region46: #{tpu_custom_call.1} parent=39 // pred_check_branch
          %240 = sbr.rel (%p238) target = $region48
        $region47: #{tpu_custom_call.1} parent=39 // pred_region
          %241 = dma.done [#allocation6], 1024
        $region48: #{tpu_custom_call.1} parent=39 // pred_fallthru
          _
        %s242 = sand.u32 %s31, 1
        %s243 = scalar_lea.sflag [#allocation3], %s242
        %s244 = sand.u32 %s31, 1
        %s245 = smul.addr %s244, 16
        %s246 = scalar_lea.vmem [#allocation2], %s245
        %p247 = pneg %p44
        %p248 = pneg %p41
        %p249 = pneg %p65
        %p250 = pneg %p62
        %p251 = pneg %p86
        %p252 = pneg %p83
        %p253 = pneg %p107
        %p254 = pneg %p104
        %p255 = pneg %p128
        %p256 = pneg %p125
        %p257 = pneg %p154
        %p258 = pneg %p151
        %s259 = sand.u32 %s141, 1
        %s260 = scalar_lea.sflag [#allocation4], %s259
        %s261 = sand.u32 %s141, 1
        %s262 = smul.addr %s261, 16
        %s263 = scalar_lea.vmem [#allocation7], %s262
        %s264 = smul.u32 2, %s23
        %s265 = ssub.s32 3, %s264
        %p266 = scmp.lt.s32.totalorder %s265, 2
        %s267 = scalar_select %p266, %s265, 2
        %s268 = smul.u32 128, %s267
        %s269 = smul.u32 2, %s23
        %s270 = ssub.s32 3, %s269
        %p271 = scmp.lt.s32.totalorder %s270, 2
        %s272 = scalar_select %p271, %s270, 2
        %s273 = smul.u32 128, %s272
        %v275 = vld [vmem:[%s233] sm:$0xff]
        %v276 = vld [vmem:[%s233 + $0x8] sm:$0xff]
        %277 = vadd.xlane.f32.xlu0 %v275
        %v278 = vpop.xlane.xlu0 %277
        %279 = vadd.xlane.f32.xlu0 %v276
        %v280 = vpop.xlane.xlu0 %279
        %v281 = vmul.f32 %v275, %v275
        %v282 = vmul.f32 %v276, %v276
        %283 = vadd.xlane.f32.xlu0 %v281
        %v284 = vpop.xlane.xlu0 %283
        %285 = vadd.xlane.f32.xlu0 %v282
        %v286 = vpop.xlane.xlu0 %285
        %v287 = vmul.f32 %v278, 0.0078125
        %v288 = vmul.f32 %v280, 0.0078125
        %v289 = vmul.f32 %v284, 0.0078125
        %v290 = vmul.f32 %v286, 0.0078125
        %v291 = vmul.f32 %v287, %v287
        %v292 = vmul.f32 %v288, %v288
        %v293 = vsub.f32 %v289, %v291
        %v294 = vsub.f32 %v290, %v292
        %v295 = vmax.f32 %v293, 0.0
        %v296 = vmax.f32 %v294, 0.0
        %v297 = vadd.f32 %v295, 1e-05
        %v298 = vadd.f32 %v296, 1e-05
        %v299 = vrsqrt.pop %v297
        %v300 = vrsqrt.pop %v298
        %v301 = vsub.f32 %v275, %v287
        %v302 = vsub.f32 %v276, %v288
        %v303 = vmul.f32 %v301, %v299
        %v304 = vmul.f32 %v302, %v300
        %v305 = vld [vmem:[%s1] sm:$0x1]
        %v307 = vlaneseq
        %v308 = vshrl.u32 %v307, 7
        %v309 = vsub.s32 0, %v308
        %v310 = vrot.slane %v305, %v309
        %v312 = vmul.f32 %v303, %v310
        %v313 = vmul.f32 %v304, %v310
        %v314 = vld [vmem:[%s2] sm:$0x1]
        %v316 = vlaneseq
        %v317 = vshrl.u32 %v316, 7
        %v318 = vsub.s32 0, %v317
        %v319 = vrot.slane %v314, %v318
        %v321 = vadd.f32 %v312, %v319
        %v322 = vadd.f32 %v313, %v319
        %v323 = vpack.c.bf16 %v322, %v321
        %v324 = vld [vmem:[#allocation5] sm:$0xf]
        %v325 = vld [vmem:[#allocation5 + $0x4] sm:$0xf]
        %v326 = vld [vmem:[#allocation5 + $0x8] sm:$0xf]
        %v327 = vld [vmem:[#allocation5 + $0xc] sm:$0xf]
        %v328 = vld [vmem:[#allocation5 + $0x10] sm:$0xf]
        %v329 = vld [vmem:[#allocation5 + $0x14] sm:$0xf]
        %v330 = vld [vmem:[#allocation5 + $0x18] sm:$0xf]
        %v331 = vld [vmem:[#allocation5 + $0x1c] sm:$0xf]
        %v332 = vld [vmem:[#allocation5 + $0x20] sm:$0xf]
        %v333 = vld [vmem:[#allocation5 + $0x24] sm:$0xf]
        %v334 = vld [vmem:[#allocation5 + $0x28] sm:$0xf]
        %v335 = vld [vmem:[#allocation5 + $0x2c] sm:$0xf]
        %v336 = vld [vmem:[#allocation5 + $0x30] sm:$0xf]
        %v337 = vld [vmem:[#allocation5 + $0x34] sm:$0xf]
        %v338 = vld [vmem:[#allocation5 + $0x38] sm:$0xf]
        %v339 = vld [vmem:[#allocation5 + $0x3c] sm:$0xf]
        %v340 = vld [vmem:[%s4] sm:$0x1]
        %v342 = vlaneseq
        %v343 = vshrl.u32 %v342, 7
        %v344 = vsub.s32 0, %v343
        %v345 = vrot.slane %v340, %v344
        %v363 = vunpack.c.l.b16 %v324
        %v364 = vunpack.c.l.b16 %v325
        %v365 = vunpack.c.l.b16 %v326
        %v366 = vunpack.c.l.b16 %v327
        %v367 = vunpack.c.l.b16 %v328
        %v368 = vunpack.c.l.b16 %v329
        %v369 = vunpack.c.l.b16 %v330
        %v370 = vunpack.c.l.b16 %v331
        %v371 = vunpack.c.l.b16 %v332
        %v372 = vunpack.c.l.b16 %v333
        %v373 = vunpack.c.l.b16 %v334
        %v374 = vunpack.c.l.b16 %v335
        %v375 = vunpack.c.l.b16 %v336
        %v376 = vunpack.c.l.b16 %v337
        %v377 = vunpack.c.l.b16 %v338
        %v378 = vunpack.c.l.b16 %v339
        %v379 = vpack.c.b16 %v364, %v363
        %v380 = vpack.c.b16 %v366, %v365
        %v381 = vpack.c.b16 %v368, %v367
        %v382 = vpack.c.b16 %v370, %v369
        %v383 = vpack.c.b16 %v372, %v371
        %v384 = vpack.c.b16 %v374, %v373
        %v385 = vpack.c.b16 %v376, %v375
        %v386 = vpack.c.b16 %v378, %v377
        %395 = vmatprep.subr.bf16.mxu0 0
        %396 = vmatpush1.bf16.msra.mxu0 %v386
        %397 = vmatprep.subr.bf16.mxu0 0
        %398 = vmatpush1.bf16.msra.mxu0 %v385
        %399 = vmatprep.subr.bf16.mxu0 0
        %400 = vmatpush1.bf16.msra.mxu0 %v384
        %401 = vmatprep.subr.bf16.mxu0 0
        %402 = vmatpush1.bf16.msra.mxu0 %v383
        %403 = vmatprep.subr.bf16.mxu0 0
        %404 = vmatpush1.bf16.msra.mxu0 %v382
        %405 = vmatprep.subr.bf16.mxu0 0
        %406 = vmatpush1.bf16.msra.mxu0 %v381
        %407 = vmatprep.subr.bf16.mxu0 0
        %408 = vmatpush1.bf16.msra.mxu0 %v380
        %409 = vmatprep.subr.bf16.mxu0 0
        %410 = vmatpush1.bf16.msra.mxu0 %v379
        %411 = vmatprep.subr.bf16.mxu0 0
        %412 = vmatpush2.bf16.msra.mxu0 0
        %413 = vmatprep.subr.bf16.mxu0 0
        %414 = vmatpush2.bf16.msra.mxu0 0
        %415 = vmatprep.subr.bf16.mxu0 0
        %416 = vmatpush2.bf16.msra.mxu0 0
        %417 = vmatprep.subr.bf16.mxu0 0
        %418 = vmatpush2.bf16.msra.mxu0 0
        %419 = vmatprep.subr.bf16.mxu0 0
        %420 = vmatpush2.bf16.msra.mxu0 0
        %421 = vmatprep.subr.bf16.mxu0 0
        %422 = vmatpush2.bf16.msra.mxu0 0
        %423 = vmatprep.subr.bf16.mxu0 0
        %424 = vmatpush2.bf16.msra.mxu0 0
        %425 = vmatprep.subr.bf16.mxu0 0
        %426 = vmatpush2.bf16.msra.mxu0 0
        %427 = vmatprep.mubr.bf16.mxu0 0
        %428 = vmatmul.mubr.bf16.gmra.mxu0 %v323
        %v429 = vpop.f32.mrf.mxu0
        %v430 = vadd.f32 %v345, %v429
        %v431 = vpop.f32.mrf.mxu0
        %v432 = vpop.f32.mrf.mxu0
        %v433 = vadd.f32 %v345, %v432
        %v434 = vpop.f32.mrf.mxu0
        %435 = vdwg.mxu0
        %436 = vst [vmem:[%s263] sm:$0xff] %v430
        %437 = vst [vmem:[%s263 + $0x8] sm:$0xff] %v433
        %s438 = sand.u32 %s141, 1
        %s439 = scalar_lea.sflag [#allocation4], %s438
        %s440 = sand.u32 %s141, 1
        %s441 = smul.addr %s440, 16
        %s442 = scalar_lea.vmem [#allocation7], %s441
        // Predicated region
        $region49: #{tpu_custom_call.1} parent=39 // pred_check
          %p443 = pneg %p151
        $region50: #{tpu_custom_call.1} parent=39 // pred_check_branch
          %445 = sbr.rel (%p443) target = $region52
        $region51: #{tpu_custom_call.1} parent=39 // pred_region
          %s446 = smul.u32 2, %s23
          %s447 = ssub.s32 3, %s446
          %p448 = scmp.lt.s32.totalorder %s447, 2
          %s449 = scalar_select %p448, %s447, 2
          %s450 = smul.u32 128, %s449
          %s452 = ssub.s32 256, %s450
          %453 = vsyncadd %s439, %s452
          %p454 = scmp.ne.s32.totalorder 0, %s450
          %s455 = smul.addr %s446, 128
          %s456 = scalar_lea.hbm %s5, %s455
          %s457 = smul.u32 8, %s449
          %s458 = sshll.u32 %s442, 4
          %s459 = int_to_ptr.vmem [resolvable:$true] %s458
          %s460 = sshll.u32 %s457, 4
          %464 = dma.vmem_to_hbm [thread:$0]  (%p454), %s459, %s460, %s456, %s439, 128, 128, 8
        $region52: #{tpu_custom_call.1} parent=39 // pred_fallthru
          _
      $region40: #{tpu_custom_call.1} parent=5 // pred_fallthru
        _
      %p465 = scmp.le.s32.totalorder 2, %s18
      // Predicated region
      $region53: #{tpu_custom_call.1} parent=5 // pred_check
        %p466 = pneg %p465
      $region54: #{tpu_custom_call.1} parent=5 // pred_check_branch
        %468 = sbr.rel (%p466) target = $region56
      $region55: #{tpu_custom_call.1} parent=5 // pred_region
        %s469 = ssub.s32 %s18, 2
        // Predicated region
        $region57: #{tpu_custom_call.1} parent=55 // pred_check
          %p470 = pneg %p157
        $region58: #{tpu_custom_call.1} parent=55 // pred_check_branch
          %472 = sbr.rel (%p470) target = $region60
        $region59: #{tpu_custom_call.1} parent=55 // pred_region
          %s473 = sand.u32 %s142, 1
          %s474 = scalar_lea.sflag [#allocation4], %s473
          %s475 = sand.u32 %s142, 1
          %s476 = smul.addr %s475, 16
          %s477 = scalar_lea.vmem [#allocation7], %s476
          %478 = dma.done %s474, 256
        $region60: #{tpu_custom_call.1} parent=55 // pred_fallthru
          _
      $region56: #{tpu_custom_call.1} parent=5 // pred_fallthru
        _
    $region6: #{tpu_custom_call.1} parent=1 // loop_footer
      %s22 = sadd.s32 1, %s18
    $region7: #{tpu_custom_call.1} parent=1 // loop_footer_branch
      %17 = sbr.rel target = $region3
    $region8: #{tpu_custom_call.1} parent=1 // loop_exit
      _
    %479 = vsyncpa [#allocation3], 1
    %s480 = scalar_lea.sflag [#allocation3], 1
    %481 = vsyncpa %s480, 1
    %482 = vsyncpa [#allocation6], 1
    %483 = vsyncpa [#allocation4], 1
    %s484 = scalar_lea.sflag [#allocation4], 1
    %485 = vsyncpa %s484, 1

</llo_original>
